<compile_context>
chip_gen: v7x
topology: tpu7x:2x2x1
jax: 0.10.0
libtpu: 0.0.40
codegen_flags: <defaults>
</compile_context>

<pallas_src>
import functools

import jax
import jax.numpy as jnp
from jax import lax
from jax.experimental import pallas as pl
from jax.experimental.pallas import tpu as pltpu

VMEM_SPEC = pl.BlockSpec(memory_space=pltpu.MemorySpace.VMEM)
SUBLANE = 8                              # f32 sublane tile
UNROLL = 4                               # bounded time-loop unroll
VMEM_LIMIT = 64 * 1024 * 1024            # explicit scoped-VMEM limit (fits v7x's 64 MiB)
CHUNK_VMEM_BUDGET = 24 * 1024 * 1024     # chunk buffers budget (headroom for weights)


def _round_up(x, m):
    return ((x + m - 1) // m) * m


def _pick_chunk(T, Bp, D, H, max_chunk=None):
    """Largest Tc dividing T whose chunk-resident buffers fit CHUNK_VMEM_BUDGET."""
    # double-buffered fwd+rev x views, double-buffered fwd/bwd outputs, xp scratch (f32)
    per_t = 4 * Bp * (2 * 2 * D + 2 * 2 * H + 2 * 4 * H)
    cap = max(1, CHUNK_VMEM_BUDGET // per_t)
    if max_chunk is not None:
        cap = min(cap, max_chunk)
    cap = min(cap, T)
    for d in range(int(cap), 0, -1):
        if T % d == 0:
            return d
    return 1


# ----------------------------------------------------------------------------
# Image encoder projection kernel (pooled features -> hidden-dim tokens).
# TODO(synk): MixImageEncoder's definition is not in the reference source; it is
# replaced by a deterministic mean-pool + linear projection with the same output
# shape (num_image_embeds tokens of width H).  Pooling is done in JAX (at real
# resolutions it should be gridded over HW).
# ----------------------------------------------------------------------------
def img_proj_kernel(gp_ref, rp_ref, wg_ref, wr_ref, go_ref, ro_ref):
    # gp_ref: (B, 3)  rp_ref: (B*R, 3)  wg_ref: (3, G*H)  wr_ref: (3, H)
    go_ref[...] = jnp.dot(gp_ref[...], wg_ref[...], preferred_element_type=jnp.float32)
    ro_ref[...] = jnp.dot(rp_ref[...], wr_ref[...], preferred_element_type=jnp.float32)


def run_img_encoder(global_image, region_image, wg, wr):
    B = global_image.shape[0]
    R = region_image.shape[1]
    H = wr.shape[-1]
    G = wg.shape[-1] // H
    gp = jnp.mean(global_image.astype(jnp.float32), axis=(2, 3))                # (B, 3)
    rp = jnp.mean(region_image.astype(jnp.float32), axis=(3, 4)).reshape(B * R, 3)
    go, ro = pl.pallas_call(
        img_proj_kernel,
        out_shape=(jax.ShapeDtypeStruct((B, G * H), jnp.float32),
                   jax.ShapeDtypeStruct((B * R, H), jnp.float32)),
        in_specs=[VMEM_SPEC] * 4,
        out_specs=(VMEM_SPEC, VMEM_SPEC),
    )(gp, rp, wg, wr)
    # token-major (G+R, B, H) so the downstream embedding path stays time-major
    g_tok = go.reshape(B, G, H).transpose(1, 0, 2)
    r_tok = ro.reshape(B, R, H).transpose(1, 0, 2)
    return jnp.concatenate([g_tok, r_tok], axis=0)


# ----------------------------------------------------------------------------
# Embedding sum + LayerNorm kernel (BERT-style, eps = 1e-12), time-major input.
# One call covers the concatenated image + text sequence.
# ----------------------------------------------------------------------------
def add_ln_kernel(tok_ref, pos_ref, typ_ref, gamma_ref, beta_ref, out_ref):
    x = tok_ref[...] + pos_ref[...] + typ_ref[...]        # (S, B, H)
    mean = jnp.mean(x, axis=-1, keepdims=True)
    var = jnp.mean(jnp.square(x - mean), axis=-1, keepdims=True)
    y = (x - mean) * lax.rsqrt(var + 1e-12)
    out_ref[...] = y * gamma_ref[...] + beta_ref[...]


def embed_layernorm(tok, pos, typ, gamma, beta):
    S, B, H = tok.shape
    return pl.pallas_call(
        add_ln_kernel,
        out_shape=jax.ShapeDtypeStruct((S, B, H), jnp.float32),
        in_specs=[VMEM_SPEC] * 5,
        out_specs=VMEM_SPEC,
    )(tok, pos, typ, gamma.reshape(1, 1, H), beta.reshape(1, 1, H))


# ----------------------------------------------------------------------------
# Full bidirectional LSTM layer, grid-tiled over time chunks.
# PyTorch gate order i, f, g, o.  Combined bias b = b_ih + b_hh.
# ----------------------------------------------------------------------------
def bilstm_layer_kernel(Tc, Bp, H,
                        xf_ref, xr_ref,            # (Tc*Bp, D): chunk i / chunk G-1-i
                        wih_f_ref, wih_b_ref,      # (D, 4H) bf16 per direction
                        whh_f_ref, whh_b_ref,      # (H, 4H) bf16 per direction
                        b_f_ref, b_b_ref,          # (1, 4H) f32
                        hf_out_ref, hb_out_ref,    # (Tc*Bp, H) fwd / bwd hidden
                        xpf_ref, xpb_ref,          # (Tc*Bp, 4H) f32 scratch
                        hf_c, cf_c, hb_c, cb_c):   # (Bp, H) f32 persistent carries
    @pl.when(pl.program_id(0) == 0)
    def _init():
        for r in (hf_c, cf_c, hb_c, cb_c):
            r[...] = jnp.zeros_like(r)

    # Hoisted per-chunk input projection: one MXU push per direction per chunk.
    xpf_ref[...] = (jnp.dot(xf_ref[...].astype(jnp.bfloat16), wih_f_ref[...],
                            preferred_element_type=jnp.float32) + b_f_ref[...])
    xpb_ref[...] = (jnp.dot(xr_ref[...].astype(jnp.bfloat16), wih_b_ref[...],
                            preferred_element_type=jnp.float32) + b_b_ref[...])

    whh_f = whh_f_ref[...]
    whh_b = whh_b_ref[...]

    def gates_to_hc(g, c):
        i = jax.nn.sigmoid(g[:, :H])
        f = jax.nn.sigmoid(g[:, H:2 * H])
        gg = jnp.tanh(g[:, 2 * H:3 * H])
        o = jax.nn.sigmoid(g[:, 3 * H:])
        c_new = f * c + i * gg
        return o * jnp.tanh(c_new), c_new

    def step(j, carry):
        h_f, c_f, h_b, c_b = carry
        rf = pl.multiple_of(j * Bp, Bp)               # fwd local time j
        rb = pl.multiple_of((Tc - 1 - j) * Bp, Bp)    # bwd local time Tc-1-j
        # Two separate per-direction recurrent dots (no zero-padded block-diag).
        gf = xpf_ref[pl.ds(rf, Bp), :] + jnp.dot(
            h_f.astype(jnp.bfloat16), whh_f, preferred_element_type=jnp.float32)
        gb = xpb_ref[pl.ds(rb, Bp), :] + jnp.dot(
            h_b.astype(jnp.bfloat16), whh_b, preferred_element_type=jnp.float32)
        h_f, c_f = gates_to_hc(gf, c_f)
        h_b, c_b = gates_to_hc(gb, c_b)
        hf_out_ref[pl.ds(rf, Bp), :] = h_f            # lane-dense (Bp, H) stores
        hb_out_ref[pl.ds(rb, Bp), :] = h_b
        return (h_f, c_f, h_b, c_b)

    carry0 = (hf_c[...], cf_c[...], hb_c[...], cb_c[...])
    h_f, c_f, h_b, c_b = lax.fori_loop(0, Tc, step, carry0, unroll=UNROLL)
    hf_c[...], cf_c[...], hb_c[...], cb_c[...] = h_f, c_f, h_b, c_b


def bilstm_full_layer(x2d, layer, T, Bp, H, *, max_chunk=None):
    D = x2d.shape[-1]
    Tc = _pick_chunk(T, Bp, D, H, max_chunk)
    G = T // Tc
    kernel = functools.partial(bilstm_layer_kernel, Tc, Bp, H)
    grid_spec = pltpu.PrefetchScalarGridSpec(
        num_scalar_prefetch=0,
        grid=(G,),
        in_specs=[
            pl.BlockSpec((Tc * Bp, D), lambda i: (i, 0)),           # x, forward chunks
            pl.BlockSpec((Tc * Bp, D), lambda i: (G - 1 - i, 0)),   # x, reversed chunks
            pl.BlockSpec((D, 4 * H), lambda i: (0, 0)),             # wih_f
            pl.BlockSpec((D, 4 * H), lambda i: (0, 0)),             # wih_b
            pl.BlockSpec((H, 4 * H), lambda i: (0, 0)),             # whh_f
            pl.BlockSpec((H, 4 * H), lambda i: (0, 0)),             # whh_b
            pl.BlockSpec((1, 4 * H), lambda i: (0, 0)),             # b_f
            pl.BlockSpec((1, 4 * H), lambda i: (0, 0)),             # b_b
        ],
        out_specs=(
            pl.BlockSpec((Tc * Bp, H), lambda i: (i, 0)),           # fwd hidden
            pl.BlockSpec((Tc * Bp, H), lambda i: (G - 1 - i, 0)),   # bwd hidden
        ),
        scratch_shapes=[
            pltpu.VMEM((Tc * Bp, 4 * H), jnp.float32),   # xp fwd
            pltpu.VMEM((Tc * Bp, 4 * H), jnp.float32),   # xp bwd
            pltpu.VMEM((Bp, H), jnp.float32),            # h fwd carry
            pltpu.VMEM((Bp, H), jnp.float32),            # c fwd carry
            pltpu.VMEM((Bp, H), jnp.float32),            # h bwd carry
            pltpu.VMEM((Bp, H), jnp.float32),            # c bwd carry
        ],
    )
    hf, hb = pl.pallas_call(
        kernel,
        out_shape=(jax.ShapeDtypeStruct((T * Bp, H), jnp.float32),
                   jax.ShapeDtypeStruct((T * Bp, H), jnp.float32)),
        grid_spec=grid_spec,
        compiler_params=pltpu.CompilerParams(
            dimension_semantics=("arbitrary",),
            vmem_limit_bytes=VMEM_LIMIT),
    )(x2d, x2d, layer["wih_f"], layer["wih_b"], layer["whh_f"], layer["whh_b"],
      layer["b_f"], layer["b_b"])
    return jnp.concatenate([hf, hb], axis=-1)          # (T*Bp, 2H), time-major


# ----------------------------------------------------------------------------
# Final BiLSTM layer fused with pooler + classifier, grid-tiled over reversed
# time chunks.  Only lstm_out[:, 0] is consumed downstream:
#   * backward direction: full reversed recurrence, final state == h_bwd at t=0,
#   * forward direction: exactly one step from (h0, c0) = 0 (W_hh term is 0),
#     computed at the last grid step, where chunk 0 (containing t=0) is resident.
# ----------------------------------------------------------------------------
def bilstm_last_head_kernel(Tc, Bp, H,
                            xr_ref,                     # (Tc*Bp, D): chunk G-1-i
                            wih_f_ref, wih_b_ref,       # (D, 4H) bf16
                            whh_b_ref,                  # (H, 4H) bf16
                            b_f_ref, b_b_ref,           # (1, 4H) f32
                            wp_f_ref, wp_b_ref,         # (H, H) bf16 pooler halves
                            bp_ref, wc_ref,             # (1, H) f32, (H, C) bf16
                            out_ref,                    # (Bp, C)
                            xpb_ref, hb_c, cb_c):       # scratch
    i = pl.program_id(0)

    @pl.when(i == 0)
    def _init():
        hb_c[...] = jnp.zeros_like(hb_c)
        cb_c[...] = jnp.zeros_like(cb_c)
        out_ref[...] = jnp.zeros_like(out_ref)

    # Backward-direction input projection for this chunk, hoisted off the loop.
    xpb_ref[...] = (jnp.dot(xr_ref[...].astype(jnp.bfloat16), wih_b_ref[...],
                            preferred_element_type=jnp.float32) + b_b_ref[...])
    whh_b = whh_b_ref[...]

    def step(j, carry):
        h_b, c_b = carry
        rb = pl.multiple_of((Tc - 1 - j) * Bp, Bp)
        g = xpb_ref[pl.ds(rb, Bp), :] + jnp.dot(
            h_b.astype(jnp.bfloat16), whh_b, preferred_element_type=jnp.float32)
        ii = jax.nn.sigmoid(g[:, :H])
        f = jax.nn.sigmoid(g[:, H:2 * H])
        gg = jnp.tanh(g[:, 2 * H:3 * H])
        o = jax.nn.sigmoid(g[:, 3 * H:])
        c_new = f * c_b + ii * gg
        return o * jnp.tanh(c_new), c_new

    h_b, c_b = lax.fori_loop(0, Tc, step, (hb_c[...], cb_c[...]), unroll=UNROLL)
    hb_c[...], cb_c[...] = h_b, c_b

    @pl.when(i == pl.num_programs(0) - 1)
    def _head():
        # At the last grid step the reversed view holds chunk 0; rows [0:Bp] are t=0.
        x0 = xr_ref[pl.ds(0, Bp), :].astype(jnp.bfloat16)
        gf = (jnp.dot(x0, wih_f_ref[...], preferred_element_type=jnp.float32)
              + b_f_ref[...])
        i_f = jax.nn.sigmoid(gf[:, :H])
        g_f = jnp.tanh(gf[:, 2 * H:3 * H])
        o_f = jax.nn.sigmoid(gf[:, 3 * H:])
        h_f0 = o_f * jnp.tanh(i_f * g_f)              # exact: c0 == 0
        # pooled = tanh(pooler([h_f0 ; h_b0])); pooler split per direction -> no concat.
        pooled = jnp.tanh(
            jnp.dot(h_f0.astype(jnp.bfloat16), wp_f_ref[...],
                    preferred_element_type=jnp.float32)
            + jnp.dot(h_b.astype(jnp.bfloat16), wp_b_ref[...],
                      preferred_element_type=jnp.float32)
            + bp_ref[...])
        out_ref[...] = jnp.dot(pooled.astype(jnp.bfloat16), wc_ref[...],
                               preferred_element_type=jnp.float32)


def bilstm_last_and_head(x2d, layer, wp_f, wp_b, bp, wc, T, Bp, H, *, max_chunk=None):
    D = x2d.shape[-1]
    C = wc.shape[-1]
    Tc = _pick_chunk(T, Bp, D, H, max_chunk)
    G = T // Tc
    kernel = functools.partial(bilstm_last_head_kernel, Tc, Bp, H)
    grid_spec = pltpu.PrefetchScalarGridSpec(
        num_scalar_prefetch=0,
        grid=(G,),
        in_specs=[
            pl.BlockSpec((Tc * Bp, D), lambda i: (G - 1 - i, 0)),   # reversed chunks
            pl.BlockSpec((D, 4 * H), lambda i: (0, 0)),             # wih_f (t=0 only)
            pl.BlockSpec((D, 4 * H), lambda i: (0, 0)),             # wih_b
            pl.BlockSpec((H, 4 * H), lambda i: (0, 0)),             # whh_b
            pl.BlockSpec((1, 4 * H), lambda i: (0, 0)),             # b_f
            pl.BlockSpec((1, 4 * H), lambda i: (0, 0)),             # b_b
            pl.BlockSpec((H, H), lambda i: (0, 0)),                 # wp_f
            pl.BlockSpec((H, H), lambda i: (0, 0)),                 # wp_b
            pl.BlockSpec((1, H), lambda i: (0, 0)),                 # bp
            pl.BlockSpec((H, C), lambda i: (0, 0)),                 # wc
        ],
        out_specs=pl.BlockSpec((Bp, C), lambda i: (0, 0)),
        scratch_shapes=[
            pltpu.VMEM((Tc * Bp, 4 * H), jnp.float32),   # xp bwd
            pltpu.VMEM((Bp, H), jnp.float32),            # h bwd carry
            pltpu.VMEM((Bp, H), jnp.float32),            # c bwd carry
        ],
    )
    return pl.pallas_call(
        kernel,
        out_shape=jax.ShapeDtypeStruct((Bp, C), jnp.float32),
        grid_spec=grid_spec,
        compiler_params=pltpu.CompilerParams(
            dimension_semantics=("arbitrary",),
            vmem_limit_bytes=VMEM_LIMIT),
    )(x2d, layer["wih_f"], layer["wih_b"], layer["whh_b"],
      layer["b_f"], layer["b_b"], wp_f, wp_b, bp, wc)


# ----------------------------------------------------------------------------
# Full forward (eval semantics, dropout == identity).
# ----------------------------------------------------------------------------
def mttv_forward(params, txt, mask, segment, global_image, region_image, cfg,
                 *, max_chunk=None):
    B = txt.shape[0]
    H, G, R = cfg["hidden"], cfg["G"], cfg["R"]
    NI = G + R                                   # args.num_image_embeds

    # extended attention mask: computed in the reference forward but unused by the
    # LSTM path (no BERT attention layers are run) -> computed and dropped (DCE'd).
    attn = jnp.concatenate([jnp.ones((B, NI + 2), jnp.int32), mask], axis=1)
    _ = (1.0 - attn[:, None, None, :].astype(jnp.float32)) * -10000.0

    we, pe, te = params["word_emb"], params["pos_emb"], params["type_emb"]

    # --- MixImageEncoder (stand-in), token-major (NI, B, H) ---
    img = run_img_encoder(global_image, region_image, params["wg"], params["wr"])

    # --- fused ImageBert + Bert embeddings, built time-major (S, B, H) ---
    s_img = NI + 2
    t_txt = txt.shape[1]
    S = s_img + t_txt

    cls_emb = jnp.broadcast_to(we[cfg["cls_id"]][None, None, :], (1, B, H))
    sep_emb = jnp.broadcast_to(we[cfg["sep_id"]][None, None, :], (1, B, H))
    txt_tok = jnp.take(we, txt.T, axis=0)                                # (t_txt, B, H)
    tok_all = jnp.concatenate([cls_emb, img, sep_emb, txt_tok], axis=0)  # (S, B, H)

    # positions restart at 0 for the image segment and for the text segment
    pos_all = jnp.concatenate([pe[:s_img], pe[:t_txt]], axis=0)          # (S, H)
    pos_all = jnp.broadcast_to(pos_all[:, None, :], (S, B, H))

    # img token-type ids: 0 for cls+global tokens, 1 for region tokens + sep
    img_type_ids = jnp.concatenate(
        [jnp.zeros((G + 1,), jnp.int32), jnp.ones((R + 1,), jnp.int32)], axis=0)
    img_typ = jnp.broadcast_to(
        jnp.take(te, img_type_ids, axis=0)[:, None, :], (s_img, B, H))
    txt_typ = jnp.take(te, segment.T, axis=0)                            # (t_txt, B, H)
    typ_all = jnp.concatenate([img_typ, txt_typ], axis=0)                # (S, B, H)

    enc_in = embed_layernorm(tok_all, pos_all, typ_all,
                             params["ln_gamma"], params["ln_beta"])      # (S, B, H)

    # Pad batch to a sublane multiple so every per-timestep (Bp, .) slab in the
    # LSTM kernels is tile-aligned; padded rows are independent garbage, sliced off.
    Bp = _round_up(B, SUBLANE)
    x = jnp.pad(enc_in, ((0, 0), (0, Bp - B), (0, 0)))
    x2d = x.reshape(S * Bp, H)                                           # time-major 2-D

    # --- BiLSTM stack (chunked, pipelined) + fused pooler/classifier ---
    for layer in params["lstm_layers"][:-1]:
        x2d = bilstm_full_layer(x2d, layer, S, Bp, H, max_chunk=max_chunk)
    logits = bilstm_last_and_head(x2d, params["lstm_layers"][-1],
                                  params["wp_f"], params["wp_b"], params["bp"],
                                  params["wc"], S, Bp, H, max_chunk=max_chunk)
    return logits[:B]


# ----------------------------------------------------------------------------
# Deterministic parameter init (shapes follow the module's __init__), packed into
# the fused kernel layouts.  Per direction the PyTorch weights map as:
#   wih = weight_ih.T  -> (d_in, 4H) gate order i,f,g,o ; whh = weight_hh.T (H, 4H)
#   b   = (b_ih + b_hh) -> (1, 4H)
# pooler: Linear(2H, H) split into per-direction halves wp_f/wp_b; clf: Linear(H, C, bias=False)
# ----------------------------------------------------------------------------
def init_params(key, *, H, V, P, L, C, G, R):
    ks = iter(jax.random.split(key, 64))

    def nrm(shape, scale=0.02):
        return scale * jax.random.normal(next(ks), shape, jnp.float32)

    params = {
        "word_emb": nrm((V, H)),          # bert.embeddings.word_embeddings
        "pos_emb": nrm((P, H)),           # bert.embeddings.position_embeddings
        "type_emb": nrm((2, H)),          # bert.embeddings.token_type_embeddings
        "ln_gamma": jnp.ones((H,), jnp.float32),
        "ln_beta": jnp.zeros((H,), jnp.float32),
        "wg": nrm((3, G * H)),            # synthetic MixImageEncoder proj (global)
        "wr": nrm((3, H)),                # synthetic MixImageEncoder proj (regions)
        "wp_f": nrm((H, H)).astype(jnp.bfloat16),
        "wp_b": nrm((H, H)).astype(jnp.bfloat16),
        "bp": jnp.zeros((1, H), jnp.float32),
        "wc": nrm((H, C)).astype(jnp.bfloat16),
    }

    layers = []
    d_in = H
    for _ in range(L):
        layer = {}
        for tag in ("f", "b"):
            layer[f"wih_{tag}"] = nrm((d_in, 4 * H), 0.1).astype(jnp.bfloat16)
            layer[f"whh_{tag}"] = nrm((H, 4 * H), 0.1).astype(jnp.bfloat16)
            layer[f"b_{tag}"] = nrm((1, 4 * H), 0.1)
        layers.append(layer)
        d_in = 2 * H
    params["lstm_layers"] = layers
    return params


if __name__ == "__main__":
    key = jax.random.PRNGKey(0)
    B, H, V, P = 2, 128, 96, 32         # batch, hidden_size, vocab, max positions
    L, C = 2, 4                         # encoder_layer_num, n_classes
    G, R = 2, 2                         # global_image_embeds, region_image_embeds
    T_TXT = 8                           # -> S = (G+R) + 2 + 8 = 14

    cfg = dict(hidden=H, G=G, R=R, cls_id=2, sep_id=3)
    pkey, dkey = jax.random.split(key)
    params = init_params(pkey, H=H, V=V, P=P, L=L, C=C, G=G, R=R)

    k1, k2, k3 = jax.random.split(dkey, 3)
    txt = jax.random.randint(k1, (B, T_TXT), 4, V)
    mask = jnp.ones((B, T_TXT), jnp.int32)
    segment = jnp.zeros((B, T_TXT), jnp.int32)
    global_image = jax.random.normal(k2, (B, 3, 16, 16), jnp.float32)      # NCHW
    region_image = jax.random.normal(k3, (B, R, 3, 16, 16), jnp.float32)   # N,R,CHW

    # Chunked path (max_chunk=8 -> Tc=7, 2 grid steps per layer: exercises the
    # time-chunk pipeline + persistent h/c carries).
    out = mttv_forward(params, txt, mask, segment, global_image, region_image,
                       cfg, max_chunk=8)
    jax.block_until_ready(out)
    assert out.shape == (B, C) and out.dtype == jnp.float32
    assert bool(jnp.isfinite(out).all())

    # Consistency check: single-chunk path (Tc = S) must match the chunked path.
    out1 = mttv_forward(params, txt, mask, segment, global_image, region_image,
                        cfg, max_chunk=None)
    jax.block_until_ready(out1)
    assert bool(jnp.allclose(out, out1, atol=1e-5, rtol=1e-5))
    print("KERNEL_OK")
</pallas_src>

<mosaic_0001>
module attributes {stable_mosaic.version = 11 : i64} {
  func.func @img_proj_kernel(%arg0: memref<2x3xf32, #tpu.memory_space<vmem>>, %arg1: memref<4x3xf32, #tpu.memory_space<vmem>>, %arg2: memref<3x256xf32, #tpu.memory_space<vmem>>, %arg3: memref<3x128xf32, #tpu.memory_space<vmem>>, %arg4: memref<2x256xf32, #tpu.memory_space<vmem>>, %arg5: memref<4x128xf32, #tpu.memory_space<vmem>>) attributes {dimension_semantics = [], scalar_prefetch = 0 : i64, scratch_operands = 0 : i64, tpu.core_type = #tpu.core_type<tc>} {
    %c0 = arith.constant 0 : index
    %c0_0 = arith.constant 0 : index
    %0 = vector.load %arg0[%c0, %c0_0] : memref<2x3xf32, #tpu.memory_space<vmem>>, vector<2x3xf32>
    %c0_1 = arith.constant 0 : index
    %c0_2 = arith.constant 0 : index
    %1 = vector.load %arg2[%c0_1, %c0_2] : memref<3x256xf32, #tpu.memory_space<vmem>>, vector<3x256xf32>
    %cst = arith.constant dense<0.000000e+00> : vector<2x256xf32>
    %2 = tpu.matmul %0, %1, %cst {dimension_numbers = #tpu.dot_dimension_numbers<[1], [0], [0], [1], [0, 0, 1, 1], [], []>} : vector<2x3xf32>, vector<3x256xf32>, vector<2x256xf32> -> vector<2x256xf32>
    %c0_3 = arith.constant 0 : index
    %c0_4 = arith.constant 0 : index
    %3 = vector.load %arg4[%c0_3, %c0_4] : memref<2x256xf32, #tpu.memory_space<vmem>>, vector<2x256xf32>
    tpu.vector_store %arg4[%c0_3, %c0_4], %2 {strides = array<i32>} : memref<2x256xf32, #tpu.memory_space<vmem>>, vector<2x256xf32>,
    %c0_5 = arith.constant 0 : index
    %c0_6 = arith.constant 0 : index
    %4 = vector.load %arg1[%c0_5, %c0_6] : memref<4x3xf32, #tpu.memory_space<vmem>>, vector<4x3xf32>
    %c0_7 = arith.constant 0 : index
    %c0_8 = arith.constant 0 : index
    %5 = vector.load %arg3[%c0_7, %c0_8] : memref<3x128xf32, #tpu.memory_space<vmem>>, vector<3x128xf32>
    %cst_9 = arith.constant dense<0.000000e+00> : vector<4x128xf32>
    %6 = tpu.matmul %4, %5, %cst_9 {dimension_numbers = #tpu.dot_dimension_numbers<[1], [0], [0], [1], [0, 0, 1, 1], [], []>} : vector<4x3xf32>, vector<3x128xf32>, vector<4x128xf32> -> vector<4x128xf32>
    %c0_10 = arith.constant 0 : index
    %c0_11 = arith.constant 0 : index
    %7 = vector.load %arg5[%c0_10, %c0_11] : memref<4x128xf32, #tpu.memory_space<vmem>>, vector<4x128xf32>
    tpu.vector_store %arg5[%c0_10, %c0_11], %6 {strides = array<i32>} : memref<4x128xf32, #tpu.memory_space<vmem>>, vector<4x128xf32>,
    return
  }
}

</mosaic_0001>

<llo_original>
// kernel: tpu_custom_call.1
$region0: #{tpu_custom_call.1}
  #allocation0 [shape = 'u32[]', space=smem, size = 0x4, offset = 0x4, fixed_abs, tag = 'smem constant byte address 0x4 - core index']
  #allocation1 [shape = 'u32[144,128]{1,0:T(1,128)}', space=vmem, size = 0x12000, scoped, tag = 'internal scratch']
  %s0 = inlined_call_operand.hbm [shape: f32[2,3], index: 0, kind: input, shape index: {}]
  %s1 = inlined_call_operand.hbm [shape: f32[4,3], index: 1, kind: input, shape index: {}]
  %s2 = inlined_call_operand.hbm [shape: f32[3,256], index: 2, kind: input, shape index: {}]
  %s3 = inlined_call_operand.vmem [shape: f32[3,128], index: 3, kind: input, shape index: {}]
  %s4 = inlined_call_operand.hbm [shape: f32[2,256], index: 4, kind: output, shape index: {0}]
  %s5 = inlined_call_operand.hbm [shape: f32[4,128], index: 5, kind: output, shape index: {1}]
  %6 = xla_tuple %s4, %s5
  %s7 = sld [smem:[#allocation0]]
  $region46: #{tpu_custom_call.1} parent=0
    _
  %s9 = ssub.s32 1, %s7
  %s10 = scalar_select 0, %s9, %s7
  $region1: #{tpu_custom_call.1} parent=0
    #allocation2 [shape = 'u8[1024]{0}', space=vmem, size = 0x400, scoped, tag = 'input window, operand 0, single buffered']
    #allocation3 [shape = 's32[1]{0}', space=sflag, size = 0x4, scoped, tag = 'scoped memory for tpu_custom_call.1']
    #allocation4 [shape = 's32[1]{0}', space=sflag, size = 0x4, scoped, tag = 'scoped memory for tpu_custom_call.1']
    #allocation5 [shape = 'u8[2048]{0}', space=vmem, size = 0x800, scoped, tag = 'input window, operand 1, single buffered']
    #allocation6 [shape = 's32[1]{0}', space=sflag, size = 0x4, scoped, tag = 'scoped memory for tpu_custom_call.1']
    #allocation7 [shape = 'u8[4096]{0}', space=vmem, size = 0x1000, scoped, tag = 'input window, operand 2, single buffered']
    #allocation8 [shape = 'u8[2048]{0}', space=vmem, size = 0x800, scoped, tag = 'output window, operand 0, single buffered']
    #allocation9 [shape = 'u8[2048]{0}', space=vmem, size = 0x800, scoped, tag = 'output window, operand 1, single buffered']
    #allocation10 [shape = 's32[1]{0}', space=sflag, size = 0x4, scoped, tag = 'scoped memory for tpu_custom_call.1']
    %11 = vsyncpa [#allocation3], 0
    %12 = vsyncpa [#allocation6], 0
    %13 = vsyncpa [#allocation4], 0
    %14 = vsyncpa [#allocation10], 0
    // Predicated region
    $region2: #{tpu_custom_call.1} parent=1 // pred_check
      _
    $region3: #{tpu_custom_call.1} parent=1 // pred_check_branch
      %16 = sbr.rel (0) target = $region5
    $region4: #{tpu_custom_call.1} parent=1 // pred_region
      %s18 = ssub.s32 32, 32
      %19 = vsyncadd [#allocation3], %s18
      %s21 = sshll.u32 [#allocation2], 4
      %s22 = int_to_ptr.vmem [resolvable:$true] %s21
      %24 = dma.hbm_to_vmem [thread:$0]  %s0, 32, %s22, [#allocation3]
    $region5: #{tpu_custom_call.1} parent=1 // pred_fallthru
      _
    // Predicated region
    $region6: #{tpu_custom_call.1} parent=1 // pred_check
      _
    $region7: #{tpu_custom_call.1} parent=1 // pred_check_branch
      %26 = sbr.rel (0) target = $region9
    $region8: #{tpu_custom_call.1} parent=1 // pred_region
      %s28 = ssub.s32 64, 64
      %29 = vsyncadd [#allocation6], %s28
      %s31 = sshll.u32 [#allocation5], 4
      %s32 = int_to_ptr.vmem [resolvable:$true] %s31
      %34 = dma.hbm_to_vmem [thread:$0]  %s1, 64, %s32, [#allocation6]
    $region9: #{tpu_custom_call.1} parent=1 // pred_fallthru
      _
    // Predicated region
    $region10: #{tpu_custom_call.1} parent=1 // pred_check
      _
    $region11: #{tpu_custom_call.1} parent=1 // pred_check_branch
      %36 = sbr.rel (0) target = $region13
    $region12: #{tpu_custom_call.1} parent=1 // pred_region
      %s38 = ssub.s32 128, 128
      %39 = vsyncadd [#allocation6], %s38
      %s41 = sshll.u32 [#allocation7], 4
      %s42 = int_to_ptr.vmem [resolvable:$true] %s41
      %44 = dma.hbm_to_vmem [thread:$0]  %s2, 128, %s42, [#allocation6]
    $region13: #{tpu_custom_call.1} parent=1 // pred_fallthru
      _
    // Predicated region
    $region14: #{tpu_custom_call.1} parent=1 // pred_check
      _
    $region15: #{tpu_custom_call.1} parent=1 // pred_check_branch
      %46 = sbr.rel (0) target = $region17
    $region16: #{tpu_custom_call.1} parent=1 // pred_region
      _
    $region17: #{tpu_custom_call.1} parent=1 // pred_fallthru
      _
    // Predicated region
    $region18: #{tpu_custom_call.1} parent=1 // pred_check
      _
    $region19: #{tpu_custom_call.1} parent=1 // pred_check_branch
      %48 = sbr.rel (0) target = $region21
    $region20: #{tpu_custom_call.1} parent=1 // pred_region
      %49 = dma.done [#allocation3], 32
    $region21: #{tpu_custom_call.1} parent=1 // pred_fallthru
      _
    // Predicated region
    $region22: #{tpu_custom_call.1} parent=1 // pred_check
      _
    $region23: #{tpu_custom_call.1} parent=1 // pred_check_branch
      %51 = sbr.rel (0) target = $region25
    $region24: #{tpu_custom_call.1} parent=1 // pred_region
      %52 = dma.done [#allocation6], 64
    $region25: #{tpu_custom_call.1} parent=1 // pred_fallthru
      _
    // Predicated region
    $region26: #{tpu_custom_call.1} parent=1 // pred_check
      _
    $region27: #{tpu_custom_call.1} parent=1 // pred_check_branch
      %54 = sbr.rel (0) target = $region29
    $region28: #{tpu_custom_call.1} parent=1 // pred_region
      %55 = dma.done [#allocation6], 128
    $region29: #{tpu_custom_call.1} parent=1 // pred_fallthru
      _
    %v56 = vld [vmem:[#allocation2] sm:$0x3]
    %v57 = vld [vmem:[#allocation7] sm:$0x77]
    %v59 = vcombine.high %v57, %v57
    %vm60 = vcmask 23552
    %v62 = vsel %vm60, %v56, 0
    %vm64 = vcmask 1042432
    %v65 = vsel %vm64, %v57, 0
    %v67 = vsel %vm64, %v59, 0
    %69 = vmatprep.subr.mxu0 %v67
    %70 = vmatpush1.msra.mxu0 %v65
    %71 = vmatprep.subr.mxu0 0.0
    %72 = vmatpush1.msra.mxu0 0.0
    %73 = vmatprep.subr.mxu0 0.0
    %74 = vmatpush1.msra.mxu0 0.0
    %75 = vmatprep.subr.mxu0 0.0
    %76 = vmatpush1.msra.mxu0 0.0
    %77 = vmatprep.subr.mxu0 0.0
    %78 = vmatpush1.msra.mxu0 0.0
    %79 = vmatprep.subr.mxu0 0.0
    %80 = vmatpush1.msra.mxu0 0.0
    %81 = vmatprep.subr.mxu0 0.0
    %82 = vmatpush1.msra.mxu0 0.0
    %83 = vmatprep.subr.mxu0 0.0
    %84 = vmatpush1.msra.mxu0 0.0
    %85 = vmatprep.subr.mxu0 0.0
    %86 = vmatpush1.msra.mxu0 0.0
    %87 = vmatprep.subr.mxu0 0.0
    %88 = vmatpush1.msra.mxu0 0.0
    %89 = vmatprep.subr.mxu0 0.0
    %90 = vmatpush1.msra.mxu0 0.0
    %91 = vmatprep.subr.mxu0 0.0
    %92 = vmatpush1.msra.mxu0 0.0
    %93 = vmatprep.subr.mxu0 0.0
    %94 = vmatpush1.msra.mxu0 0.0
    %95 = vmatprep.subr.mxu0 0.0
    %96 = vmatpush1.msra.mxu0 0.0
    %97 = vmatprep.subr.mxu0 0.0
    %98 = vmatpush1.msra.mxu0 0.0
    %99 = vmatprep.subr.mxu0 0.0
    %100 = vmatpush1.msra.mxu0 0.0
    %101 = vmatprep.subr.mxu0 0.0
    %102 = vmatpush1.msra.mxu0 0.0
    %103 = vmatprep.subr.mxu0 0.0
    %104 = vmatpush1.msra.mxu0 0.0
    %105 = vmatprep.subr.mxu0 0.0
    %106 = vmatpush1.msra.mxu0 0.0
    %107 = vmatprep.subr.mxu0 0.0
    %108 = vmatpush1.msra.mxu0 0.0
    %109 = vmatprep.subr.mxu0 0.0
    %110 = vmatpush1.msra.mxu0 0.0
    %111 = vmatprep.subr.mxu0 0.0
    %112 = vmatpush1.msra.mxu0 0.0
    %113 = vmatprep.subr.mxu0 0.0
    %114 = vmatpush1.msra.mxu0 0.0
    %115 = vmatprep.subr.mxu0 0.0
    %116 = vmatpush1.msra.mxu0 0.0
    %117 = vmatprep.subr.mxu0 0.0
    %118 = vmatpush1.msra.mxu0 0.0
    %119 = vmatprep.subr.mxu0 0.0
    %120 = vmatpush1.msra.mxu0 0.0
    %121 = vmatprep.subr.mxu0 0.0
    %122 = vmatpush1.msra.mxu0 0.0
    %123 = vmatprep.subr.mxu0 0.0
    %124 = vmatpush1.msra.mxu0 0.0
    %125 = vmatprep.subr.mxu0 0.0
    %126 = vmatpush1.msra.mxu0 0.0
    %127 = vmatprep.subr.mxu0 0.0
    %128 = vmatpush1.msra.mxu0 0.0
    %129 = vmatprep.subr.mxu0 0.0
    %130 = vmatpush1.msra.mxu0 0.0
    %131 = vmatprep.subr.mxu0 0.0
    %132 = vmatpush1.msra.mxu0 0.0
    %133 = vmatprep.mubr.f32.mxu0 0.0
    %134 = vmatmul.mubr.f32.gmra.mrb[0].mxu0 %v62
    %v135 = vpop.f32.mrb[0].mxu0
    %v136 = vadd.f32 0.0, %v135
    %v137 = vpop.f32.mrb[0].mxu0
    %v138 = vadd.f32 0.0, %v137
    %139 = vdwg.mxu0
    %v142 = vcombine.low %v136, %v138
    %v144 = vunpack.c.l.s4 1983009808
    %v145 = vunpack.c.0.s8 %v144
    %v146 = vlaneseq
    %v147 = vshrl.u32 %v146, 7
    %v148 = vsub.s32 %v145, %v147
    %v149 = vrot.slane %v142, %v148
    %151 = vst [vmem:[#allocation8] sm:$0xf] %v149
    %v152 = vld [vmem:[#allocation5] sm:$0xf]
    %v153 = vld [vmem:[%s3] sm:$0x7]
    %v155 = vsel %vm60, %v152, 0
    %v158 = vsel %vm64, %v153, 0
    %160 = vmatprep.subr.mxu0 0.0
    %161 = vmatpush1.msra.mxu0 %v158
    %162 = vmatprep.subr.mxu0 0.0
    %163 = vmatpush1.msra.mxu0 0.0
    %164 = vmatprep.subr.mxu0 0.0
    %165 = vmatpush1.msra.mxu0 0.0
    %166 = vmatprep.subr.mxu0 0.0
    %167 = vmatpush1.msra.mxu0 0.0
    %168 = vmatprep.subr.mxu0 0.0
    %169 = vmatpush1.msra.mxu0 0.0
    %170 = vmatprep.subr.mxu0 0.0
    %171 = vmatpush1.msra.mxu0 0.0
    %172 = vmatprep.subr.mxu0 0.0
    %173 = vmatpush1.msra.mxu0 0.0
    %174 = vmatprep.subr.mxu0 0.0
    %175 = vmatpush1.msra.mxu0 0.0
    %176 = vmatprep.subr.mxu0 0.0
    %177 = vmatpush1.msra.mxu0 0.0
    %178 = vmatprep.subr.mxu0 0.0
    %179 = vmatpush1.msra.mxu0 0.0
    %180 = vmatprep.subr.mxu0 0.0
    %181 = vmatpush1.msra.mxu0 0.0
    %182 = vmatprep.subr.mxu0 0.0
    %183 = vmatpush1.msra.mxu0 0.0
    %184 = vmatprep.subr.mxu0 0.0
    %185 = vmatpush1.msra.mxu0 0.0
    %186 = vmatprep.subr.mxu0 0.0
    %187 = vmatpush1.msra.mxu0 0.0
    %188 = vmatprep.subr.mxu0 0.0
    %189 = vmatpush1.msra.mxu0 0.0
    %190 = vmatprep.subr.mxu0 0.0
    %191 = vmatpush1.msra.mxu0 0.0
    %192 = vmatprep.subr.mxu0 0.0
    %193 = vmatpush1.msra.mxu0 0.0
    %194 = vmatprep.subr.mxu0 0.0
    %195 = vmatpush1.msra.mxu0 0.0
    %196 = vmatprep.subr.mxu0 0.0
    %197 = vmatpush1.msra.mxu0 0.0
    %198 = vmatprep.subr.mxu0 0.0
    %199 = vmatpush1.msra.mxu0 0.0
    %200 = vmatprep.subr.mxu0 0.0
    %201 = vmatpush1.msra.mxu0 0.0
    %202 = vmatprep.subr.mxu0 0.0
    %203 = vmatpush1.msra.mxu0 0.0
    %204 = vmatprep.subr.mxu0 0.0
    %205 = vmatpush1.msra.mxu0 0.0
    %206 = vmatprep.subr.mxu0 0.0
    %207 = vmatpush1.msra.mxu0 0.0
    %208 = vmatprep.subr.mxu0 0.0
    %209 = vmatpush1.msra.mxu0 0.0
    %210 = vmatprep.subr.mxu0 0.0
    %211 = vmatpush1.msra.mxu0 0.0
    %212 = vmatprep.subr.mxu0 0.0
    %213 = vmatpush1.msra.mxu0 0.0
    %214 = vmatprep.subr.mxu0 0.0
    %215 = vmatpush1.msra.mxu0 0.0
    %216 = vmatprep.subr.mxu0 0.0
    %217 = vmatpush1.msra.mxu0 0.0
    %218 = vmatprep.subr.mxu0 0.0
    %219 = vmatpush1.msra.mxu0 0.0
    %220 = vmatprep.subr.mxu0 0.0
    %221 = vmatpush1.msra.mxu0 0.0
    %222 = vmatprep.subr.mxu0 0.0
    %223 = vmatpush1.msra.mxu0 0.0
    %224 = vmatprep.mubr.f32.mxu0 0.0
    %225 = vmatmul.mubr.f32.gmra.mrb[0].mxu0 %v155
    %v226 = vpop.f32.mrb[0].mxu0
    %v227 = vadd.f32 0.0, %v226
    %v228 = vpop.f32.mrb[0].mxu0
    %229 = vdwg.mxu0
    %230 = vst [vmem:[#allocation9] sm:$0xf] %v227
    // Predicated region
    $region30: #{tpu_custom_call.1} parent=1 // pred_check
      _
    $region31: #{tpu_custom_call.1} parent=1 // pred_check_branch
      %232 = sbr.rel (0) target = $region33
    $region32: #{tpu_custom_call.1} parent=1 // pred_region
      %s234 = ssub.s32 64, 64
      %235 = vsyncadd [#allocation4], %s234
      %s237 = sshll.u32 [#allocation8], 4
      %s238 = int_to_ptr.vmem [resolvable:$true] %s237
      %240 = dma.vmem_to_hbm [thread:$0]  %s238, 64, %s4, [#allocation4]
    $region33: #{tpu_custom_call.1} parent=1 // pred_fallthru
      _
    // Predicated region
    $region34: #{tpu_custom_call.1} parent=1 // pred_check
      _
    $region35: #{tpu_custom_call.1} parent=1 // pred_check_branch
      %242 = sbr.rel (0) target = $region37
    $region36: #{tpu_custom_call.1} parent=1 // pred_region
      %s244 = ssub.s32 64, 64
      %245 = vsyncadd [#allocation10], %s244
      %s247 = sshll.u32 [#allocation9], 4
      %s248 = int_to_ptr.vmem [resolvable:$true] %s247
      %250 = dma.vmem_to_hbm [thread:$0]  %s248, 64, %s5, [#allocation10]
    $region37: #{tpu_custom_call.1} parent=1 // pred_fallthru
      _
    // Predicated region
    $region38: #{tpu_custom_call.1} parent=1 // pred_check
      _
    $region39: #{tpu_custom_call.1} parent=1 // pred_check_branch
      %252 = sbr.rel (0) target = $region41
    $region40: #{tpu_custom_call.1} parent=1 // pred_region
      %253 = dma.done [#allocation4], 64
    $region41: #{tpu_custom_call.1} parent=1 // pred_fallthru
      _
    // Predicated region
    $region42: #{tpu_custom_call.1} parent=1 // pred_check
      _
    $region43: #{tpu_custom_call.1} parent=1 // pred_check_branch
      %255 = sbr.rel (0) target = $region45
    $region44: #{tpu_custom_call.1} parent=1 // pred_region
      %256 = dma.done [#allocation10], 64
    $region45: #{tpu_custom_call.1} parent=1 // pred_fallthru
      _
    %257 = vsyncpa [#allocation3], 1
    %258 = vsyncpa [#allocation6], 1
    %259 = vsyncpa [#allocation4], 1
    %260 = vsyncpa [#allocation10], 1

</llo_original>
